<compile_context>
chip_gen: v7x
topology: tpu7x:2x2x1
jax: 0.10.0
libtpu: 0.0.40
codegen_flags: <defaults>
</compile_context>

<pallas_src>
import functools

import jax
import jax.numpy as jnp
from jax.experimental import pallas as pl
from jax.experimental.pallas import tpu as pltpu


def _round_up(n, m):
    return ((n + m - 1) // m) * m


def _mlp_kernel(x_ref, w1_ref, b1_ref, w2_ref, b2_ref, oT_ref):
    # x_ref : (tb, F) f32   | w1_ref: (H, F) bf16 | b1_ref: (H, 1) f32
    # w2_ref: (H, 1) f32    | b2_ref: (1, 1) f32 (SMEM) | oT_ref: (1, tb) f32
    x_bf = x_ref[...].astype(jnp.bfloat16)                       # in-kernel cast (VPU, hidden under DMA)

    # Hidden layer on the MXU: contract F-with-F so no transpose of x hits HBM.
    h = jax.lax.dot_general(
        w1_ref[...], x_bf,
        dimension_numbers=(((1,), (1,)), ((), ())),
        preferred_element_type=jnp.float32,
    )                                                            # [H, tb], f32 accumulate
    h = jnp.maximum(h + b1_ref[...], 0.0)                        # bias + ReLU (VPU, f32)

    # Output layer (out_features = 1): VPU multiply + XLU sublane reduction instead of N=1 matmul.
    z = jnp.sum(h * w2_ref[...], axis=0, keepdims=True)          # [1, tb]
    z = z + b2_ref[0, 0]                                         # scalar bias from SMEM
    oT_ref[...] = jax.nn.sigmoid(z).astype(oT_ref.dtype)         # lane-dense store


@functools.partial(jax.jit, static_argnames=("tb",))
def binary_neuralnet_forward(x, w1, b1, w2, b2, *, tb=2048):
    """Forward pass of Binary_NeuralNet.

    x : [B, F] f32
    w1: [H, F], b1: [H], w2: [1, H], b2: [1]   (PyTorch nn.Linear layout)
    returns y_pred: [B, 1] f32
    """
    B, F = x.shape
    H = w1.shape[0]

    # Large lane-dense batch tile (amortizes per-grid-step pipeline overhead), snapped down
    # for small batches so B <= tb collapses to a single grid step with minimal padding.
    tb = max(128, min(tb, _round_up(B, 128)))
    Bp = _round_up(B, tb)

    # Only the trailing remainder (if any) is zero-padded; no transpose/cast pass over x.
    x_in = x if Bp == B else jnp.pad(x, ((0, Bp - B), (0, 0)))

    # Tiny parameter reshapes/casts (a few KiB total).
    w1_bf = w1.astype(jnp.bfloat16)                   # (H, F)
    b1_col = b1.reshape(H, 1).astype(jnp.float32)     # (H, 1)
    w2_col = w2.reshape(H, 1).astype(jnp.float32)     # (H, 1)
    b2_2d = b2.reshape(1, 1).astype(jnp.float32)      # (1, 1) -> SMEM scalar

    grid = (Bp // tb,)
    outT = pl.pallas_call(
        _mlp_kernel,
        out_shape=jax.ShapeDtypeStruct((1, Bp), jnp.float32),
        grid=grid,
        in_specs=[
            pl.BlockSpec((tb, F), lambda i: (i, 0)),             # x tile, pipelined over batch
            pl.BlockSpec((H, F), lambda i: (0, 0)),              # w1 resident across grid
            pl.BlockSpec((H, 1), lambda i: (0, 0)),              # b1 resident
            pl.BlockSpec((H, 1), lambda i: (0, 0)),              # w2 resident
            pl.BlockSpec(memory_space=pltpu.MemorySpace.SMEM),   # b2 scalar in SMEM
        ],
        out_specs=pl.BlockSpec((1, tb), lambda i: (0, i)),       # lane-dense [1, tb] output blocks
        compiler_params=pltpu.CompilerParams(
            dimension_semantics=("parallel",),
        ),
    )(x_in, w1_bf, b1_col, w2_col, b2_2d)

    return outT[0, :B].reshape(B, 1)


if __name__ == "__main__":
    input_size = 32
    hidden_size = 32
    batch = 384

    key = jax.random.PRNGKey(0)
    kx, k1, kb1, k2, kb2 = jax.random.split(key, 5)

    # Deterministic synthetic parameters in PyTorch nn.Linear layout: weight [out, in], bias [out].
    bound1 = 1.0 / (input_size ** 0.5)
    bound2 = 1.0 / (hidden_size ** 0.5)
    w1 = jax.random.uniform(k1, (hidden_size, input_size), jnp.float32,
                            minval=-bound1, maxval=bound1)
    b1 = jax.random.uniform(kb1, (hidden_size,), jnp.float32,
                            minval=-bound1, maxval=bound1)
    w2 = jax.random.uniform(k2, (1, hidden_size), jnp.float32,
                            minval=-bound2, maxval=bound2)
    b2 = jax.random.uniform(kb2, (1,), jnp.float32,
                            minval=-bound2, maxval=bound2)

    x = jax.random.normal(kx, (batch, input_size), jnp.float32)

    # Default path: tb snaps to 384 -> single grid step, zero padded columns.
    y = jax.block_until_ready(binary_neuralnet_forward(x, w1, b1, w2, b2))
    # Also exercise the multi-tile pipelined path (3 batch tiles of 128).
    y_tiled = jax.block_until_ready(binary_neuralnet_forward(x, w1, b1, w2, b2, tb=128))

    # Pure-JAX reference with the same bf16 rounding applied to the MXU operands.
    x_r = x.astype(jnp.bfloat16).astype(jnp.float32)
    w1_r = w1.astype(jnp.bfloat16).astype(jnp.float32)
    ref = jax.nn.sigmoid(jnp.maximum(x_r @ w1_r.T + b1, 0.0) @ w2.T + b2)

    assert y.shape == (batch, 1)
    assert y_tiled.shape == (batch, 1)
    assert jnp.allclose(y, ref, atol=1e-4, rtol=1e-4), float(jnp.max(jnp.abs(y - ref)))
    assert jnp.allclose(y_tiled, ref, atol=1e-4, rtol=1e-4), float(jnp.max(jnp.abs(y_tiled - ref)))

    print("KERNEL_OK")
</pallas_src>

<mosaic_0001>
module attributes {stable_mosaic.version = 11 : i64} {
  func.func @_mlp_kernel(%arg0: i32, %arg1: memref<384x32xf32, #tpu.memory_space<vmem>>, %arg2: memref<32x32xbf16, #tpu.memory_space<vmem>>, %arg3: memref<32x1xf32, #tpu.memory_space<vmem>>, %arg4: memref<32x1xf32, #tpu.memory_space<vmem>>, %arg5: memref<1x1xf32, #tpu.memory_space<smem>>, %arg6: memref<1x384xf32, #tpu.memory_space<vmem>>) attributes {dimension_semantics = [#tpu.dimension_semantics<parallel>], iteration_bounds = array<i64: 1>, scalar_prefetch = 0 : i64, scratch_operands = 0 : i64, tpu.core_type = #tpu.core_type<tc>, window_params = [{transform_indices = @transform_0, window_bounds = array<i64: 384, 32>}, {pipeline_mode = #tpu.pipeline_mode<synchronous>, transform_indices = @transform_1, window_bounds = array<i64: 32, 32>}, {pipeline_mode = #tpu.pipeline_mode<synchronous>, transform_indices = @transform_2, window_bounds = array<i64: 32, 1>}, {pipeline_mode = #tpu.pipeline_mode<synchronous>, transform_indices = @transform_3, window_bounds = array<i64: 32, 1>}, {transform_indices = @transform_4, window_bounds = array<i64: 1, 1>}, {transform_indices = @transform_5, window_bounds = array<i64: 1, 384>}]} {
    %c0 = arith.constant 0 : index
    %c0_0 = arith.constant 0 : index
    %0 = vector.load %arg1[%c0, %c0_0] : memref<384x32xf32, #tpu.memory_space<vmem>>, vector<384x32xf32>
    %1 = arith.truncf %0 : vector<384x32xf32> to vector<384x32xbf16>
    %c0_1 = arith.constant 0 : index
    %c0_2 = arith.constant 0 : index
    %2 = vector.load %arg2[%c0_1, %c0_2] : memref<32x32xbf16, #tpu.memory_space<vmem>>, vector<32x32xbf16>
    %cst = arith.constant dense<0.000000e+00> : vector<32x384xf32>
    %3 = tpu.matmul %2, %1, %cst {dimension_numbers = #tpu.dot_dimension_numbers<[1], [1], [0], [0], [0, 0, 1, 0], [], []>} : vector<32x32xbf16>, vector<384x32xbf16>, vector<32x384xf32> -> vector<32x384xf32>
    %c0_3 = arith.constant 0 : index
    %c0_4 = arith.constant 0 : index
    %4 = vector.load %arg3[%c0_3, %c0_4] : memref<32x1xf32, #tpu.memory_space<vmem>>, vector<32x1xf32>
    %5 = vector.broadcast %4 : vector<32x1xf32> to vector<32x384xf32>
    %6 = arith.addf %3, %5 : vector<32x384xf32>
    %cst_5 = arith.constant 0.000000e+00 : f32
    %7 = vector.broadcast %cst_5 : f32 to vector<32x384xf32>
    %8 = arith.maximumf %6, %7 : vector<32x384xf32>
    %c0_6 = arith.constant 0 : index
    %c0_7 = arith.constant 0 : index
    %9 = vector.load %arg4[%c0_6, %c0_7] : memref<32x1xf32, #tpu.memory_space<vmem>>, vector<32x1xf32>
    %10 = vector.broadcast %9 : vector<32x1xf32> to vector<32x384xf32>
    %11 = arith.mulf %8, %10 : vector<32x384xf32>
    %cst_8 = arith.constant dense<0.000000e+00> : vector<384xf32>
    %12 = vector.multi_reduction <add>, %11, %cst_8 [0] : vector<32x384xf32> to vector<384xf32>
    %13 = vector.shape_cast %12 : vector<384xf32> to vector<1x384xf32>
    %c0_9 = arith.constant 0 : index
    %c0_10 = arith.constant 0 : index
    %14 = memref.load %arg5[%c0_9, %c0_10] : memref<1x1xf32, #tpu.memory_space<smem>>
    %15 = vector.broadcast %14 : f32 to vector<1x384xf32>
    %16 = arith.addf %13, %15 : vector<1x384xf32>
    %17 = arith.negf %16 : vector<1x384xf32>
    %18 = math.exp %17 : vector<1x384xf32>
    %cst_11 = arith.constant 1.000000e+00 : f32
    %19 = vector.broadcast %cst_11 : f32 to vector<1x384xf32>
    %20 = arith.addf %19, %18 : vector<1x384xf32>
    %21 = arith.divf %19, %20 : vector<1x384xf32>
    %c0_12 = arith.constant 0 : index
    %c0_13 = arith.constant 0 : index
    %22 = vector.load %arg6[%c0_12, %c0_13] : memref<1x384xf32, #tpu.memory_space<vmem>>, vector<1x384xf32>
    tpu.vector_store %arg6[%c0_12, %c0_13], %21 {strides = array<i32>} : memref<1x384xf32, #tpu.memory_space<vmem>>, vector<1x384xf32>,
    return
  }
  func.func @transform_0(%arg0: i32) -> (i32, i32) {
    %c0_i32 = arith.constant 0 : i32
    %c0_i32_0 = arith.constant 0 : i32
    return %arg0, %c0_i32 : i32, i32
  }
  func.func @transform_1(%arg0: i32) -> (i32, i32) {
    %c0_i32 = arith.constant 0 : i32
    %c0_i32_0 = arith.constant 0 : i32
    %c0_i32_1 = arith.constant 0 : i32
    return %c0_i32, %c0_i32_0 : i32, i32
  }
  func.func @transform_2(%arg0: i32) -> (i32, i32) {
    %c0_i32 = arith.constant 0 : i32
    %c0_i32_0 = arith.constant 0 : i32
    %c0_i32_1 = arith.constant 0 : i32
    return %c0_i32, %c0_i32_0 : i32, i32
  }
  func.func @transform_3(%arg0: i32) -> (i32, i32) {
    %c0_i32 = arith.constant 0 : i32
    %c0_i32_0 = arith.constant 0 : i32
    %c0_i32_1 = arith.constant 0 : i32
    return %c0_i32, %c0_i32_0 : i32, i32
  }
  func.func @transform_4(%arg0: i32) -> (i32, i32) {
    %c0_i32 = arith.constant 0 : i32
    %c0_i32_0 = arith.constant 0 : i32
    %c0_i32_1 = arith.constant 0 : i32
    return %c0_i32, %c0_i32_0 : i32, i32
  }
  func.func @transform_5(%arg0: i32) -> (i32, i32) {
    %c0_i32 = arith.constant 0 : i32
    %c0_i32_0 = arith.constant 0 : i32
    return %c0_i32, %arg0 : i32, i32
  }
}

</mosaic_0001>

<llo_original>
// kernel: binary_neuralnet_forward.1
$region0: #{binary_neuralnet_forward.1}
  #allocation0 [shape = 'u32[]', space=smem, size = 0x4, offset = 0x4, fixed_abs, tag = 'smem constant byte address 0x4 - core index']
  #allocation1 [shape = 'u32[144,128]{1,0:T(1,128)}', space=vmem, size = 0x12000, scoped, tag = 'internal scratch']
  #allocation2 [shape = 'f32[1,1]{1,0:T(1,128)S(6)}', space=smem, size = 0x200, scoped, tag = 'scoped memory for binary_neuralnet_forward.1']
  %s0 = inlined_call_operand.vmem [shape: f32[384,32], index: 0, kind: input, shape index: {}]
  %s1 = inlined_call_operand.vmem [shape: bf16[32,32], index: 1, kind: input, shape index: {}]
  %s2 = inlined_call_operand.vmem [shape: f32[32,1], index: 2, kind: input, shape index: {}]
  %s3 = inlined_call_operand.vmem [shape: f32[32,1], index: 3, kind: input, shape index: {}]
  %s4 = inlined_call_operand.<no memory space> [shape: f32[1,1], index: 4, kind: input, shape index: {}]
  %s5 = inlined_call_operand.hbm [shape: f32[1,384], index: 5, kind: output, shape index: {}]
  %s6 = sld [smem:[#allocation0]]
  $region30: #{binary_neuralnet_forward.1} parent=0
    _
  %s8 = ssub.s32 1, %s6
  %s9 = scalar_select 0, %s8, %s6
  %10 = sst [smem:[#allocation2]] %s4
  $region1: #{binary_neuralnet_forward.1} parent=0
    #allocation3 [shape = 'u8[1536]{0}', space=vmem, size = 0x800, scoped, tag = 'output window, operand 0, single buffered']
    #allocation4 [shape = 's32[1]{0}', space=sflag, size = 0x4, scoped, tag = 'scoped memory for binary_neuralnet_forward.1']
    %11 = vsyncpa [#allocation4], 0
    // Predicated region
    $region2: #{binary_neuralnet_forward.1} parent=1 // pred_check
      _
    $region3: #{binary_neuralnet_forward.1} parent=1 // pred_check_branch
      %13 = sbr.rel (0) target = $region5
    $region4: #{binary_neuralnet_forward.1} parent=1 // pred_region
      _
    $region5: #{binary_neuralnet_forward.1} parent=1 // pred_fallthru
      _
    // Predicated region
    $region6: #{binary_neuralnet_forward.1} parent=1 // pred_check
      _
    $region7: #{binary_neuralnet_forward.1} parent=1 // pred_check_branch
      %15 = sbr.rel (0) target = $region9
    $region8: #{binary_neuralnet_forward.1} parent=1 // pred_region
      _
    $region9: #{binary_neuralnet_forward.1} parent=1 // pred_fallthru
      _
    // Predicated region
    $region10: #{binary_neuralnet_forward.1} parent=1 // pred_check
      _
    $region11: #{binary_neuralnet_forward.1} parent=1 // pred_check_branch
      %17 = sbr.rel (0) target = $region13
    $region12: #{binary_neuralnet_forward.1} parent=1 // pred_region
      _
    $region13: #{binary_neuralnet_forward.1} parent=1 // pred_fallthru
      _
    // Predicated region
    $region14: #{binary_neuralnet_forward.1} parent=1 // pred_check
      _
    $region15: #{binary_neuralnet_forward.1} parent=1 // pred_check_branch
      %19 = sbr.rel (0) target = $region17
    $region16: #{binary_neuralnet_forward.1} parent=1 // pred_region
      _
    $region17: #{binary_neuralnet_forward.1} parent=1 // pred_fallthru
      _
    // Predicated region
    $region18: #{binary_neuralnet_forward.1} parent=1 // pred_check
      _
    $region19: #{binary_neuralnet_forward.1} parent=1 // pred_check_branch
      %21 = sbr.rel (0) target = $region21
    $region20: #{binary_neuralnet_forward.1} parent=1 // pred_region
      _
    $region21: #{binary_neuralnet_forward.1} parent=1 // pred_fallthru
      _
    %v23 = vld [vmem:[%s0] sm:$0xff]
    %v24 = vld [vmem:[%s0 + $0x8] sm:$0xff]
    %v25 = vld [vmem:[%s0 + $0x10] sm:$0xff]
    %v26 = vld [vmem:[%s0 + $0x18] sm:$0xff]
    %v27 = vld [vmem:[%s0 + $0x20] sm:$0xff]
    %v28 = vld [vmem:[%s0 + $0x28] sm:$0xff]
    %v29 = vld [vmem:[%s0 + $0x30] sm:$0xff]
    %v30 = vld [vmem:[%s0 + $0x38] sm:$0xff]
    %v31 = vld [vmem:[%s0 + $0x40] sm:$0xff]
    %v32 = vld [vmem:[%s0 + $0x48] sm:$0xff]
    %v33 = vld [vmem:[%s0 + $0x50] sm:$0xff]
    %v34 = vld [vmem:[%s0 + $0x58] sm:$0xff]
    %v35 = vld [vmem:[%s0 + $0x60] sm:$0xff]
    %v36 = vld [vmem:[%s0 + $0x68] sm:$0xff]
    %v37 = vld [vmem:[%s0 + $0x70] sm:$0xff]
    %v38 = vld [vmem:[%s0 + $0x78] sm:$0xff]
    %v39 = vld [vmem:[%s0 + $0x80] sm:$0xff]
    %v40 = vld [vmem:[%s0 + $0x88] sm:$0xff]
    %v41 = vld [vmem:[%s0 + $0x90] sm:$0xff]
    %v42 = vld [vmem:[%s0 + $0x98] sm:$0xff]
    %v43 = vld [vmem:[%s0 + $0xa0] sm:$0xff]
    %v44 = vld [vmem:[%s0 + $0xa8] sm:$0xff]
    %v45 = vld [vmem:[%s0 + $0xb0] sm:$0xff]
    %v46 = vld [vmem:[%s0 + $0xb8] sm:$0xff]
    %v47 = vld [vmem:[%s0 + $0xc0] sm:$0xff]
    %v48 = vld [vmem:[%s0 + $0xc8] sm:$0xff]
    %v49 = vld [vmem:[%s0 + $0xd0] sm:$0xff]
    %v50 = vld [vmem:[%s0 + $0xd8] sm:$0xff]
    %v51 = vld [vmem:[%s0 + $0xe0] sm:$0xff]
    %v52 = vld [vmem:[%s0 + $0xe8] sm:$0xff]
    %v53 = vld [vmem:[%s0 + $0xf0] sm:$0xff]
    %v54 = vld [vmem:[%s0 + $0xf8] sm:$0xff]
    %v55 = vld [vmem:[%s0 + $0x100] sm:$0xff]
    %v56 = vld [vmem:[%s0 + $0x108] sm:$0xff]
    %v57 = vld [vmem:[%s0 + $0x110] sm:$0xff]
    %v58 = vld [vmem:[%s0 + $0x118] sm:$0xff]
    %v59 = vld [vmem:[%s0 + $0x120] sm:$0xff]
    %v60 = vld [vmem:[%s0 + $0x128] sm:$0xff]
    %v61 = vld [vmem:[%s0 + $0x130] sm:$0xff]
    %v62 = vld [vmem:[%s0 + $0x138] sm:$0xff]
    %v63 = vld [vmem:[%s0 + $0x140] sm:$0xff]
    %v64 = vld [vmem:[%s0 + $0x148] sm:$0xff]
    %v65 = vld [vmem:[%s0 + $0x150] sm:$0xff]
    %v66 = vld [vmem:[%s0 + $0x158] sm:$0xff]
    %v67 = vld [vmem:[%s0 + $0x160] sm:$0xff]
    %v68 = vld [vmem:[%s0 + $0x168] sm:$0xff]
    %v69 = vld [vmem:[%s0 + $0x170] sm:$0xff]
    %v70 = vld [vmem:[%s0 + $0x178] sm:$0xff]
    %v71 = vpack.c.bf16 %v24, %v23
    %v72 = vpack.c.bf16 %v26, %v25
    %v73 = vpack.c.bf16 %v28, %v27
    %v74 = vpack.c.bf16 %v30, %v29
    %v75 = vpack.c.bf16 %v32, %v31
    %v76 = vpack.c.bf16 %v34, %v33
    %v77 = vpack.c.bf16 %v36, %v35
    %v78 = vpack.c.bf16 %v38, %v37
    %v79 = vpack.c.bf16 %v40, %v39
    %v80 = vpack.c.bf16 %v42, %v41
    %v81 = vpack.c.bf16 %v44, %v43
    %v82 = vpack.c.bf16 %v46, %v45
    %v83 = vpack.c.bf16 %v48, %v47
    %v84 = vpack.c.bf16 %v50, %v49
    %v85 = vpack.c.bf16 %v52, %v51
    %v86 = vpack.c.bf16 %v54, %v53
    %v87 = vpack.c.bf16 %v56, %v55
    %v88 = vpack.c.bf16 %v58, %v57
    %v89 = vpack.c.bf16 %v60, %v59
    %v90 = vpack.c.bf16 %v62, %v61
    %v91 = vpack.c.bf16 %v64, %v63
    %v92 = vpack.c.bf16 %v66, %v65
    %v93 = vpack.c.bf16 %v68, %v67
    %v94 = vpack.c.bf16 %v70, %v69
    %v95 = vld [vmem:[%s1] sm:$0xf]
    %v96 = vld [vmem:[%s1 + $0x4] sm:$0xf]
    %v97 = vld [vmem:[%s1 + $0x8] sm:$0xf]
    %v98 = vld [vmem:[%s1 + $0xc] sm:$0xf]
    %v99 = vld [vmem:[%s2] sm:$0xff]
    %v100 = vld [vmem:[%s2 + $0x8] sm:$0xff]
    %v101 = vld [vmem:[%s2 + $0x10] sm:$0xff]
    %v102 = vld [vmem:[%s2 + $0x18] sm:$0xff]
    %104 = vset.pattern.permute.xlu0 0
    %105 = vperm.xlu0 %104, %v99
    %v106 = vpop.permute.xlu0 %105
    %109 = vset.pattern.permute.xlu0 0
    %110 = vperm.xlu0 %109, %v100
    %v111 = vpop.permute.xlu0 %110
    %114 = vset.pattern.permute.xlu0 0
    %115 = vperm.xlu0 %114, %v101
    %v116 = vpop.permute.xlu0 %115
    %119 = vset.pattern.permute.xlu0 0
    %120 = vperm.xlu0 %119, %v102
    %v121 = vpop.permute.xlu0 %120
    %v127 = vunpack.c.l.b16 %v95
    %v128 = vunpack.c.l.b16 %v96
    %v129 = vunpack.c.l.b16 %v97
    %v130 = vunpack.c.l.b16 %v98
    %v131 = vpack.c.b16 %v128, %v127
    %v132 = vpack.c.b16 %v130, %v129
    %vm133 = vcmask 261120
    %v135 = vsel %vm133, %v131, 0
    %v138 = vsel %vm133, %v132, 0
    %v141 = vsel %vm133, %v71, 0
    %v144 = vsel %vm133, %v72, 0
    %v147 = vsel %vm133, %v73, 0
    %v150 = vsel %vm133, %v74, 0
    %v153 = vsel %vm133, %v75, 0
    %v156 = vsel %vm133, %v76, 0
    %v159 = vsel %vm133, %v77, 0
    %v162 = vsel %vm133, %v78, 0
    %v165 = vsel %vm133, %v79, 0
    %v168 = vsel %vm133, %v80, 0
    %v171 = vsel %vm133, %v81, 0
    %v174 = vsel %vm133, %v82, 0
    %v177 = vsel %vm133, %v83, 0
    %v180 = vsel %vm133, %v84, 0
    %v183 = vsel %vm133, %v85, 0
    %v186 = vsel %vm133, %v86, 0
    %v189 = vsel %vm133, %v87, 0
    %v192 = vsel %vm133, %v88, 0
    %v195 = vsel %vm133, %v89, 0
    %v198 = vsel %vm133, %v90, 0
    %v201 = vsel %vm133, %v91, 0
    %v204 = vsel %vm133, %v92, 0
    %v207 = vsel %vm133, %v93, 0
    %v210 = vsel %vm133, %v94, 0
    %212 = vmatprep.subr.bf16.mxu0 0
    %213 = vmatpush1.bf16.xpose.msra.mxu0 %v141
    %214 = vmatprep.subr.bf16.mxu0 0
    %215 = vmatpush1.bf16.xpose.msra.mxu0 %v144
    %216 = vmatprep.subr.bf16.mxu0 0
    %217 = vmatpush1.bf16.xpose.msra.mxu0 %v147
    %218 = vmatprep.subr.bf16.mxu0 0
    %219 = vmatpush1.bf16.xpose.msra.mxu0 %v150
    %220 = vmatprep.subr.bf16.mxu0 0
    %221 = vmatpush1.bf16.xpose.msra.mxu0 %v153
    %222 = vmatprep.subr.bf16.mxu0 0
    %223 = vmatpush1.bf16.xpose.msra.mxu0 %v156
    %224 = vmatprep.subr.bf16.mxu0 0
    %225 = vmatpush1.bf16.xpose.msra.mxu0 %v159
    %226 = vmatprep.subr.bf16.mxu0 0
    %227 = vmatpush1.bf16.xpose.msra.mxu0 %v162
    %228 = vmatprep.subr.bf16.mxu0 0
    %229 = vmatpush1.bf16.xpose.msra.mxu0 %v165
    %230 = vmatprep.subr.bf16.mxu0 0
    %231 = vmatpush1.bf16.xpose.msra.mxu0 %v168
    %232 = vmatprep.subr.bf16.mxu0 0
    %233 = vmatpush1.bf16.xpose.msra.mxu0 %v171
    %234 = vmatprep.subr.bf16.mxu0 0
    %235 = vmatpush1.bf16.xpose.msra.mxu0 %v174
    %236 = vmatprep.subr.bf16.mxu0 0
    %237 = vmatpush1.bf16.xpose.msra.mxu0 %v177
    %238 = vmatprep.subr.bf16.mxu0 0
    %239 = vmatpush1.bf16.xpose.msra.mxu0 %v180
    %240 = vmatprep.subr.bf16.mxu0 0
    %241 = vmatpush1.bf16.xpose.msra.mxu0 %v183
    %242 = vmatprep.subr.bf16.mxu0 0
    %243 = vmatpush1.bf16.xpose.msra.mxu0 %v186
    %244 = vmatprep.mubr.bf16.mxu0 0
    %245 = vmatmul.mubr.bf16.gmra.mrb[0].mxu0 %v135
    %v246 = vpop.f32.mrb[0].mxu0
    %v247 = vadd.f32 %v106, %v246
    %v248 = vpop.f32.mrb[0].mxu0
    %v249 = vadd.f32 %v106, %v248
    %v250 = vpop.f32.mrb[0].mxu0
    %v251 = vadd.f32 %v111, %v250
    %v252 = vpop.f32.mrb[0].mxu0
    %v253 = vadd.f32 %v111, %v252
    %254 = vmatprep.mubr.bf16.mxu0 0
    %255 = vmatmul.mubr.bf16.gmra.mrb[0].mxu0 %v138
    %v256 = vpop.f32.mrb[0].mxu0
    %v257 = vadd.f32 %v116, %v256
    %v258 = vpop.f32.mrb[0].mxu0
    %v259 = vadd.f32 %v116, %v258
    %v260 = vpop.f32.mrb[0].mxu0
    %v261 = vadd.f32 %v121, %v260
    %v262 = vpop.f32.mrb[0].mxu0
    %v263 = vadd.f32 %v121, %v262
    %264 = vdwg.mxu0
    %265 = vmatprep.subr.bf16.mxu0 0
    %266 = vmatpush1.bf16.xpose.msra.mxu0 %v189
    %267 = vmatprep.subr.bf16.mxu0 0
    %268 = vmatpush1.bf16.xpose.msra.mxu0 %v192
    %269 = vmatprep.subr.bf16.mxu0 0
    %270 = vmatpush1.bf16.xpose.msra.mxu0 %v195
    %271 = vmatprep.subr.bf16.mxu0 0
    %272 = vmatpush1.bf16.xpose.msra.mxu0 %v198
    %273 = vmatprep.subr.bf16.mxu0 0
    %274 = vmatpush1.bf16.xpose.msra.mxu0 %v201
    %275 = vmatprep.subr.bf16.mxu0 0
    %276 = vmatpush1.bf16.xpose.msra.mxu0 %v204
    %277 = vmatprep.subr.bf16.mxu0 0
    %278 = vmatpush1.bf16.xpose.msra.mxu0 %v207
    %279 = vmatprep.subr.bf16.mxu0 0
    %280 = vmatpush1.bf16.xpose.msra.mxu0 %v210
    %281 = vmatprep.subr.bf16.mxu0 0
    %282 = vmatpush1.bf16.xpose.msra.mxu0 0
    %283 = vmatprep.subr.bf16.mxu0 0
    %284 = vmatpush1.bf16.xpose.msra.mxu0 0
    %285 = vmatprep.subr.bf16.mxu0 0
    %286 = vmatpush1.bf16.xpose.msra.mxu0 0
    %287 = vmatprep.subr.bf16.mxu0 0
    %288 = vmatpush1.bf16.xpose.msra.mxu0 0
    %289 = vmatprep.subr.bf16.mxu0 0
    %290 = vmatpush1.bf16.xpose.msra.mxu0 0
    %291 = vmatprep.subr.bf16.mxu0 0
    %292 = vmatpush1.bf16.xpose.msra.mxu0 0
    %293 = vmatprep.subr.bf16.mxu0 0
    %294 = vmatpush1.bf16.xpose.msra.mxu0 0
    %295 = vmatprep.subr.bf16.mxu0 0
    %296 = vmatpush1.bf16.xpose.msra.mxu0 0
    %297 = vmatprep.mubr.bf16.mxu0 0
    %298 = vmatmul.mubr.bf16.gmra.mrb[0].mxu0 %v135
    %v299 = vpop.f32.mrb[0].mxu0
    %v300 = vadd.f32 %v106, %v299
    %v301 = vpop.f32.mrb[0].mxu0
    %v302 = vpop.f32.mrb[0].mxu0
    %v303 = vadd.f32 %v111, %v302
    %v304 = vpop.f32.mrb[0].mxu0
    %305 = vmatprep.mubr.bf16.mxu0 0
    %306 = vmatmul.mubr.bf16.gmra.mrb[0].mxu0 %v138
    %v307 = vpop.f32.mrb[0].mxu0
    %v308 = vadd.f32 %v116, %v307
    %v309 = vpop.f32.mrb[0].mxu0
    %v310 = vpop.f32.mrb[0].mxu0
    %v311 = vadd.f32 %v121, %v310
    %v312 = vpop.f32.mrb[0].mxu0
    %313 = vdwg.mxu0
    %v314 = vmax.f32 %v247, 0.0
    %v315 = vmax.f32 %v249, 0.0
    %v316 = vmax.f32 %v300, 0.0
    %v317 = vmax.f32 %v251, 0.0
    %v318 = vmax.f32 %v253, 0.0
    %v319 = vmax.f32 %v303, 0.0
    %v320 = vmax.f32 %v257, 0.0
    %v321 = vmax.f32 %v259, 0.0
    %v322 = vmax.f32 %v308, 0.0
    %v323 = vmax.f32 %v261, 0.0
    %v324 = vmax.f32 %v263, 0.0
    %v325 = vmax.f32 %v311, 0.0
    %v326 = vld [vmem:[%s3] sm:$0xff]
    %v327 = vld [vmem:[%s3 + $0x8] sm:$0xff]
    %v328 = vld [vmem:[%s3 + $0x10] sm:$0xff]
    %v329 = vld [vmem:[%s3 + $0x18] sm:$0xff]
    %331 = vset.pattern.permute.xlu0 0
    %332 = vperm.xlu0 %331, %v326
    %v333 = vpop.permute.xlu0 %332
    %336 = vset.pattern.permute.xlu0 0
    %337 = vperm.xlu0 %336, %v327
    %v338 = vpop.permute.xlu0 %337
    %341 = vset.pattern.permute.xlu0 0
    %342 = vperm.xlu0 %341, %v328
    %v343 = vpop.permute.xlu0 %342
    %346 = vset.pattern.permute.xlu0 0
    %347 = vperm.xlu0 %346, %v329
    %v348 = vpop.permute.xlu0 %347
    %v350 = vmul.f32 %v314, %v333
    %v351 = vmul.f32 %v315, %v333
    %v352 = vmul.f32 %v316, %v333
    %v353 = vmul.f32 %v317, %v338
    %v354 = vmul.f32 %v318, %v338
    %v355 = vmul.f32 %v319, %v338
    %v356 = vmul.f32 %v320, %v343
    %v357 = vmul.f32 %v321, %v343
    %v358 = vmul.f32 %v322, %v343
    %v359 = vmul.f32 %v323, %v348
    %v360 = vmul.f32 %v324, %v348
    %v361 = vmul.f32 %v325, %v348
    %v362 = vadd.f32 %v350, %v353
    %v363 = vadd.f32 %v362, %v356
    %v364 = vadd.f32 %v363, %v359
    %v365 = vrot.slane %v364, 4
    %v366 = vadd.f32 %v364, %v365
    %v367 = vrot.slane %v366, 2
    %v368 = vadd.f32 %v366, %v367
    %v369 = vrot.slane %v368, 1
    %v370 = vadd.f32 %v368, %v369
    %v371 = vadd.f32 %v351, %v354
    %v372 = vadd.f32 %v371, %v357
    %v373 = vadd.f32 %v372, %v360
    %v374 = vrot.slane %v373, 4
    %v375 = vadd.f32 %v373, %v374
    %v376 = vrot.slane %v375, 2
    %v377 = vadd.f32 %v375, %v376
    %v378 = vrot.slane %v377, 1
    %v379 = vadd.f32 %v377, %v378
    %v380 = vadd.f32 %v352, %v355
    %v381 = vadd.f32 %v380, %v358
    %v382 = vadd.f32 %v381, %v361
    %v383 = vrot.slane %v382, 4
    %v384 = vadd.f32 %v382, %v383
    %v385 = vrot.slane %v384, 2
    %v386 = vadd.f32 %v384, %v385
    %v387 = vrot.slane %v386, 1
    %v388 = vadd.f32 %v386, %v387
    %s389 = sld [smem:[#allocation2]]
    %v390 = vstv %s389
    %v391 = vadd.f32 %v370, %v390
    %v392 = vadd.f32 %v379, %v390
    %v393 = vadd.f32 %v388, %v390
    %v394 = vxor.u32 %v391, 2147483648
    %v395 = vxor.u32 %v392, 2147483648
    %v396 = vxor.u32 %v393, 2147483648
    %v397 = vmul.f32 %v394, 1.442695
    %v398 = vpow.pop %v397
    %v399 = vmul.f32 %v395, 1.442695
    %v400 = vpow.pop %v399
    %v401 = vmul.f32 %v396, 1.442695
    %v402 = vpow.pop %v401
    %v403 = vadd.f32 %v398, 1.0
    %v404 = vadd.f32 %v400, 1.0
    %v405 = vadd.f32 %v402, 1.0
    %v406 = vrcp.pop %v403
    %v407 = vmul.f32 1.0, %v406
    %v408 = vrcp.pop %v404
    %v409 = vmul.f32 1.0, %v408
    %v410 = vrcp.pop %v405
    %v411 = vmul.f32 1.0, %v410
    %v415 = vcombine.low %v407, %v409
    %v417 = vunpack.c.l.s4 1966171168
    %v418 = vunpack.c.0.s8 %v417
    %v419 = vlaneseq
    %v420 = vshrl.u32 %v419, 7
    %v421 = vsub.s32 %v418, %v420
    %v422 = vrot.slane %v415, %v421
    %v424 = vunpack.c.l.s4 1966171168
    %v425 = vunpack.c.0.s8 %v424
    %v426 = vlaneseq
    %v427 = vshrl.u32 %v426, 7
    %v428 = vsub.s32 %v425, %v427
    %v429 = vrot.slane %v411, %v428
    %v430 = vcombine.low %v422, %v429
    %v432 = vunpack.c.l.s4 1966171168
    %v433 = vunpack.c.0.s8 %v432
    %v434 = vlaneseq
    %v435 = vshrl.u32 %v434, 7
    %v436 = vsub.s32 %v433, %v435
    %v437 = vrot.slane %v430, %v436
    %v439 = vlaneseq
    %vm440 = vcmp.ge.s32.totalorder %v439, 0
    %vm441 = vcmp.lt.s32.totalorder %v439, 384
    %vm442 = vmand %vm440, %vm441
    %443 = vst.msk [vmem:[#allocation3] sm:$0x7] %vm442, %v437
    // Predicated region
    $region22: #{binary_neuralnet_forward.1} parent=1 // pred_check
      _
    $region23: #{binary_neuralnet_forward.1} parent=1 // pred_check_branch
      %445 = sbr.rel (0) target = $region25
    $region24: #{binary_neuralnet_forward.1} parent=1 // pred_region
      %s447 = ssub.s32 48, 48
      %448 = vsyncadd [#allocation4], %s447
      %s450 = sshll.u32 [#allocation3], 4
      %s451 = int_to_ptr.vmem [resolvable:$true] %s450
      %453 = dma.vmem_to_hbm [thread:$0]  %s451, 48, %s5, [#allocation4]
    $region25: #{binary_neuralnet_forward.1} parent=1 // pred_fallthru
      _
    // Predicated region
    $region26: #{binary_neuralnet_forward.1} parent=1 // pred_check
      _
    $region27: #{binary_neuralnet_forward.1} parent=1 // pred_check_branch
      %455 = sbr.rel (0) target = $region29
    $region28: #{binary_neuralnet_forward.1} parent=1 // pred_region
      %456 = dma.done [#allocation4], 48
    $region29: #{binary_neuralnet_forward.1} parent=1 // pred_fallthru
      _
    %457 = vsyncpa [#allocation4], 1

</llo_original>
